<compile_context>
chip_gen: v7x
topology: tpu7x:2x2x1
jax: 0.10.0
libtpu: 0.0.40
codegen_flags: <defaults>
</compile_context>

<pallas_src>
from functools import partial

import jax
import jax.numpy as jnp
from jax.experimental import pallas as pl
from jax.experimental.pallas import tpu as pltpu

EPS = 1e-5  # nn.LayerNorm default


def _round_up(n, m):
    return (n + m - 1) // m * m


def _vmem_capacity_bytes():
    try:
        return int(pltpu.get_tpu_info().vmem_capacity_bytes)
    except Exception:
        return 64 << 20  # conservative fallback (v7x per-TensorCore VMEM)


def _pick_col_tile(d, vmem_cap):
    """Column tile for W.  Prefer keeping the whole W resident (tn = d)."""
    if d % 128 != 0:
        # TODO(synk): pad D to a multiple of 128 (zero-pad W rows / gamma) to
        # restore lane-dense tiling for non-128-aligned hidden sizes.
        return d
    if d * d * 2 <= vmem_cap // 3:         # whole bf16 W fits comfortably
        return d
    for t in (1024, 512, 256, 128):
        if d % t == 0 and 2 * d * t * 2 <= vmem_cap // 3:
            return t
    return 128


def _layernorm_affine(x_ref, g_ref, b_ref):
    """Single-pass LayerNorm + affine, f32 on the VPU."""
    x = x_ref[...].astype(jnp.float32)
    inv_d = 1.0 / x.shape[-1]
    s1 = jnp.sum(x, axis=-1, keepdims=True)
    s2 = jnp.sum(x * x, axis=-1, keepdims=True)
    mean = s1 * inv_d
    # Biased variance (torch.nn.LayerNorm), eps inside the sqrt.  Single-pass
    # E[x^2]-mean^2 can cancel for pathological large-|mean| inputs; fine for
    # typical pre-norm activations.
    var = jnp.maximum(s2 * inv_d - mean * mean, 0.0)
    xhat = (x - mean) * jax.lax.rsqrt(var + EPS)
    return xhat * g_ref[...] + b_ref[...]


def prenorm_kernel(x_ref, g_ref, b_ref, w_ref, wb_ref, o_ref, *scratch,
                   col_tiled):
    # x_ref: (RT, D);  g/b: (1, D) f32;  w: (D, TN) bf16;  wb: (1, TN) f32
    # o_ref: (RT, TN); scratch (col-tiled only): (RT, D) bf16 normalized acts.
    if col_tiled:
        (y_ref,) = scratch
        # LayerNorm once per row tile, reused for every W column tile.
        @pl.when(pl.program_id(1) == 0)
        def _():
            y_ref[...] = _layernorm_affine(x_ref, g_ref, b_ref).astype(y_ref.dtype)
        y = y_ref[...]
    else:
        # Whole-W path: normalized activations go straight from vregs into the
        # MXU (no VMEM round trip, frees the vector-store slot).
        y = _layernorm_affine(x_ref, g_ref, b_ref).astype(w_ref.dtype)

    out = jnp.dot(y, w_ref[...], preferred_element_type=jnp.float32)
    out = out + wb_ref[...]
    o_ref[...] = out.astype(o_ref.dtype)


def prenorm(x, gamma, beta, w, wb, *, row_tile=None, col_tile=None,
            compute_dtype=jnp.bfloat16, io_dtype=None):
    """x: (B, S, D). Returns fn(LayerNorm(x)) with fn = Linear(D, D)."""
    B, S, D = x.shape
    rows = B * S

    vmem_cap = _vmem_capacity_bytes()

    # --- row tiling ---------------------------------------------------------
    # Big enough that the per-row-tile W re-stream (column-tiled path) is
    # covered by MXU work: crossover ~240 (v5e) / ~656 (v6e) / ~311 (v7x).
    if row_tile is None:
        row_tile = 1024 if vmem_cap >= (96 << 20) else 512
    rt = _round_up(min(row_tile, _round_up(rows, 16)), 16)
    # Megacore (v7x): make sure both TensorCores get at least one row tile.
    if pl.cdiv(rows, rt) < 2 and rows > 32:
        rt = _round_up(pl.cdiv(rows, 2), 16)

    # --- column tiling of W -------------------------------------------------
    tn = col_tile if col_tile is not None else _pick_col_tile(D, vmem_cap)
    assert D % tn == 0 and (tn % 128 == 0 or tn == D)
    n_col = D // tn
    col_tiled = n_col > 1

    # --- dtypes / hoisted parameter prep -------------------------------------
    x_dtype = io_dtype if io_dtype is not None else x.dtype
    x_itemsize = jnp.dtype(x_dtype).itemsize
    w_itemsize = jnp.dtype(compute_dtype).itemsize

    x2 = x.reshape(rows, D).astype(x_dtype)          # no pad: ragged last tile
    gamma2 = gamma.reshape(1, D).astype(jnp.float32)
    beta2 = beta.reshape(1, D).astype(jnp.float32)
    w_c = w.astype(compute_dtype)                    # bf16 MXU operand
    wb2 = wb.reshape(1, D).astype(jnp.float32)

    # --- VMEM budget ----------------------------------------------------------
    def vmem_est(rt_):
        w_bufs = 2 if col_tiled else 1               # W single-buffered if resident
        return (2 * rt_ * D * x_itemsize             # x (double-buffered)
                + 2 * rt_ * tn * x_itemsize          # out (double-buffered)
                + w_bufs * D * tn * w_itemsize       # W
                + w_bufs * tn * 4                    # wb
                + 2 * D * 4                          # gamma + beta (Buffered(1))
                + (rt_ * D * w_itemsize if col_tiled else 0))  # y scratch

    budget = vmem_cap - (8 << 20)
    while vmem_est(rt) > budget and rt > 64:
        rt = max(64, rt // 2)
    vmem_limit = int(min(vmem_cap - (2 << 20),
                         max(vmem_est(rt) + (8 << 20), 32 << 20)))

    n_row = pl.cdiv(rows, rt)
    grid = (n_row, n_col)

    # --- cost estimate (advisory) --------------------------------------------
    w_read_bytes = (n_row if col_tiled else 1) * D * D * w_itemsize
    cost = pl.CostEstimate(
        flops=2 * rows * D * D + 10 * rows * D,
        transcendentals=rows,
        bytes_accessed=(rows * D * x_itemsize        # x read
                        + w_read_bytes               # W (re-)reads
                        + rows * D * x_itemsize      # out write
                        + 3 * D * 4))                # gamma/beta/wb

    # --- BlockSpecs -----------------------------------------------------------
    single = pl.Buffered(1)   # grid-invariant input: one DMA, one VMEM copy
    in_specs = [
        pl.BlockSpec((rt, D), lambda i, j: (i, 0)),                      # x rows
        pl.BlockSpec((1, D), lambda i, j: (0, 0), pipeline_mode=single),  # gamma
        pl.BlockSpec((1, D), lambda i, j: (0, 0), pipeline_mode=single),  # beta
    ]
    if col_tiled:
        in_specs += [
            pl.BlockSpec((D, tn), lambda i, j: (0, j)),                   # W col tile
            pl.BlockSpec((1, tn), lambda i, j: (0, j)),                   # wb col tile
        ]
        scratch_shapes = [pltpu.VMEM((rt, D), compute_dtype)]
    else:
        in_specs += [
            pl.BlockSpec((D, D), lambda i, j: (0, 0), pipeline_mode=single),  # W resident
            pl.BlockSpec((1, D), lambda i, j: (0, 0), pipeline_mode=single),  # wb resident
        ]
        scratch_shapes = []

    out = pl.pallas_call(
        partial(prenorm_kernel, col_tiled=col_tiled),
        out_shape=jax.ShapeDtypeStruct((rows, D), x_dtype),
        grid_spec=pltpu.PrefetchScalarGridSpec(
            num_scalar_prefetch=0,
            grid=grid,
            in_specs=in_specs,
            out_specs=pl.BlockSpec((rt, tn), lambda i, j: (i, j)),
            scratch_shapes=scratch_shapes,
        ),
        compiler_params=pltpu.CompilerParams(
            dimension_semantics=("parallel", "arbitrary"),
            vmem_limit_bytes=vmem_limit),
        cost_estimate=cost,
    )(x2, gamma2, beta2, w_c, wb2)

    return out.reshape(B, S, D)


def prenorm_ref(x, gamma, beta, w, wb):
    xf = x.astype(jnp.float32)
    mean = jnp.mean(xf, axis=-1, keepdims=True)
    var = jnp.mean((xf - mean) ** 2, axis=-1, keepdims=True)
    y = (xf - mean) / jnp.sqrt(var + EPS) * gamma + beta
    return y @ w + wb


def _run_case(key, B, S, D, tol=1e-2, **kwargs):
    kx, kw, kb, kg, ke = jax.random.split(key, 5)
    x = jax.random.normal(kx, (B, S, D), dtype=jnp.float32)
    gamma = 1.0 + 0.1 * jax.random.normal(kg, (D,), dtype=jnp.float32)
    beta = 0.05 * jax.random.normal(ke, (D,), dtype=jnp.float32)
    w = jax.random.normal(kw, (D, D), dtype=jnp.float32) * 0.02
    wb = jax.random.normal(kb, (D,), dtype=jnp.float32) * 0.01

    out = jax.block_until_ready(prenorm(x, gamma, beta, w, wb, **kwargs))
    ref = prenorm_ref(x, gamma, beta, w, wb)
    assert out.shape == (B, S, D)
    err = float(jnp.max(jnp.abs(out.astype(jnp.float32) - ref)))
    assert err < tol, f"mismatch vs reference: max abs err {err}"


if __name__ == "__main__":
    key = jax.random.PRNGKey(0)
    k1, k2, k3 = jax.random.split(key, 3)

    # Whole-W resident path (D=128 bf16 W fits VMEM easily), vreg-fed GEMM.
    _run_case(k1, B=2, S=8, D=128)

    # Column-tiled W path + ragged last row tile (rows=26, rt=16): exercises
    # the LN-reuse VMEM scratch, @pl.when(j==0), and masked boundary DMAs.
    _run_case(k2, B=2, S=13, D=256, row_tile=16, col_tile=128)

    # Optional bf16 I/O for mem-bound shapes (looser tolerance vs f32 ref).
    _run_case(k3, B=2, S=8, D=128, io_dtype=jnp.bfloat16, tol=5e-2)

    print("KERNEL_OK")
</pallas_src>

<mosaic_0001>
module attributes {stable_mosaic.version = 11 : i64} {
  func.func @prenorm_kernel(%arg0: i32, %arg1: i32, %arg2: memref<16x128xf32, #tpu.memory_space<vmem>>, %arg3: memref<1x128xf32, #tpu.memory_space<vmem>>, %arg4: memref<1x128xf32, #tpu.memory_space<vmem>>, %arg5: memref<128x128xbf16, #tpu.memory_space<vmem>>, %arg6: memref<1x128xf32, #tpu.memory_space<vmem>>, %arg7: memref<16x128xf32, #tpu.memory_space<vmem>>) attributes {dimension_semantics = [#tpu.dimension_semantics<parallel>, #tpu.dimension_semantics<arbitrary>], iteration_bounds = array<i64: 1, 1>, scalar_prefetch = 0 : i64, scratch_operands = 0 : i64, tpu.core_type = #tpu.core_type<tc>, window_params = [{transform_indices = @transform_0, window_bounds = array<i64: 16, 128>}, {pipeline_mode = #tpu.pipeline_mode<synchronous>, transform_indices = @transform_1, window_bounds = array<i64: 1, 128>}, {pipeline_mode = #tpu.pipeline_mode<synchronous>, transform_indices = @transform_2, window_bounds = array<i64: 1, 128>}, {pipeline_mode = #tpu.pipeline_mode<synchronous>, transform_indices = @transform_3, window_bounds = array<i64: 128, 128>}, {pipeline_mode = #tpu.pipeline_mode<synchronous>, transform_indices = @transform_4, window_bounds = array<i64: 1, 128>}, {transform_indices = @transform_5, window_bounds = array<i64: 16, 128>}]} {
    %c0 = arith.constant 0 : index
    %c0_0 = arith.constant 0 : index
    %0 = vector.load %arg2[%c0, %c0_0] : memref<16x128xf32, #tpu.memory_space<vmem>>, vector<16x128xf32>
    %cst = arith.constant dense<0.000000e+00> : vector<16xf32>
    %1 = vector.multi_reduction <add>, %0, %cst [1] : vector<16x128xf32> to vector<16xf32>
    %2 = vector.shape_cast %1 : vector<16xf32> to vector<16x1xf32>
    %3 = arith.mulf %0, %0 : vector<16x128xf32>
    %cst_1 = arith.constant dense<0.000000e+00> : vector<16xf32>
    %4 = vector.multi_reduction <add>, %3, %cst_1 [1] : vector<16x128xf32> to vector<16xf32>
    %5 = vector.shape_cast %4 : vector<16xf32> to vector<16x1xf32>
    %cst_2 = arith.constant 7.812500e-03 : f32
    %6 = vector.broadcast %cst_2 : f32 to vector<16x1xf32>
    %7 = arith.mulf %2, %6 : vector<16x1xf32>
    %cst_3 = arith.constant 7.812500e-03 : f32
    %8 = vector.broadcast %cst_3 : f32 to vector<16x1xf32>
    %9 = arith.mulf %5, %8 : vector<16x1xf32>
    %10 = arith.mulf %7, %7 : vector<16x1xf32>
    %11 = arith.subf %9, %10 : vector<16x1xf32>
    %cst_4 = arith.constant 0.000000e+00 : f32
    %12 = vector.broadcast %cst_4 : f32 to vector<16x1xf32>
    %13 = arith.maximumf %11, %12 : vector<16x1xf32>
    %14 = vector.broadcast %7 : vector<16x1xf32> to vector<16x128xf32>
    %15 = arith.subf %0, %14 : vector<16x128xf32>
    %cst_5 = arith.constant 9.99999974E-6 : f32
    %16 = vector.broadcast %cst_5 : f32 to vector<16x1xf32>
    %17 = arith.addf %13, %16 : vector<16x1xf32>
    %18 = math.rsqrt %17 : vector<16x1xf32>
    %19 = vector.broadcast %18 : vector<16x1xf32> to vector<16x128xf32>
    %20 = arith.mulf %15, %19 : vector<16x128xf32>
    %c0_6 = arith.constant 0 : index
    %c0_7 = arith.constant 0 : index
    %21 = vector.load %arg3[%c0_6, %c0_7] : memref<1x128xf32, #tpu.memory_space<vmem>>, vector<1x128xf32>
    %22 = vector.broadcast %21 : vector<1x128xf32> to vector<16x128xf32>
    %23 = arith.mulf %20, %22 : vector<16x128xf32>
    %c0_8 = arith.constant 0 : index
    %c0_9 = arith.constant 0 : index
    %24 = vector.load %arg4[%c0_8, %c0_9] : memref<1x128xf32, #tpu.memory_space<vmem>>, vector<1x128xf32>
    %25 = vector.broadcast %24 : vector<1x128xf32> to vector<16x128xf32>
    %26 = arith.addf %23, %25 : vector<16x128xf32>
    %27 = arith.truncf %26 : vector<16x128xf32> to vector<16x128xbf16>
    %c0_10 = arith.constant 0 : index
    %c0_11 = arith.constant 0 : index
    %28 = vector.load %arg5[%c0_10, %c0_11] : memref<128x128xbf16, #tpu.memory_space<vmem>>, vector<128x128xbf16>
    %cst_12 = arith.constant dense<0.000000e+00> : vector<16x128xf32>
    %29 = tpu.matmul %27, %28, %cst_12 {dimension_numbers = #tpu.dot_dimension_numbers<[1], [0], [0], [1], [0, 0, 1, 1], [], []>} : vector<16x128xbf16>, vector<128x128xbf16>, vector<16x128xf32> -> vector<16x128xf32>
    %c0_13 = arith.constant 0 : index
    %c0_14 = arith.constant 0 : index
    %30 = vector.load %arg6[%c0_13, %c0_14] : memref<1x128xf32, #tpu.memory_space<vmem>>, vector<1x128xf32>
    %31 = vector.broadcast %30 : vector<1x128xf32> to vector<16x128xf32>
    %32 = arith.addf %29, %31 : vector<16x128xf32>
    %c0_15 = arith.constant 0 : index
    %c0_16 = arith.constant 0 : index
    %33 = vector.load %arg7[%c0_15, %c0_16] : memref<16x128xf32, #tpu.memory_space<vmem>>, vector<16x128xf32>
    tpu.vector_store %arg7[%c0_15, %c0_16], %32 {strides = array<i32>} : memref<16x128xf32, #tpu.memory_space<vmem>>, vector<16x128xf32>,
    return
  }
  func.func @transform_0(%arg0: i32, %arg1: i32) -> (i32, i32) {
    %c0_i32 = arith.constant 0 : i32
    %c0_i32_0 = arith.constant 0 : i32
    return %arg0, %c0_i32 : i32, i32
  }
  func.func @transform_1(%arg0: i32, %arg1: i32) -> (i32, i32) {
    %c0_i32 = arith.constant 0 : i32
    %c0_i32_0 = arith.constant 0 : i32
    %c0_i32_1 = arith.constant 0 : i32
    return %c0_i32, %c0_i32_0 : i32, i32
  }
  func.func @transform_2(%arg0: i32, %arg1: i32) -> (i32, i32) {
    %c0_i32 = arith.constant 0 : i32
    %c0_i32_0 = arith.constant 0 : i32
    %c0_i32_1 = arith.constant 0 : i32
    return %c0_i32, %c0_i32_0 : i32, i32
  }
  func.func @transform_3(%arg0: i32, %arg1: i32) -> (i32, i32) {
    %c0_i32 = arith.constant 0 : i32
    %c0_i32_0 = arith.constant 0 : i32
    %c0_i32_1 = arith.constant 0 : i32
    return %c0_i32, %c0_i32_0 : i32, i32
  }
  func.func @transform_4(%arg0: i32, %arg1: i32) -> (i32, i32) {
    %c0_i32 = arith.constant 0 : i32
    %c0_i32_0 = arith.constant 0 : i32
    %c0_i32_1 = arith.constant 0 : i32
    return %c0_i32, %c0_i32_0 : i32, i32
  }
  func.func @transform_5(%arg0: i32, %arg1: i32) -> (i32, i32) {
    %c0_i32 = arith.constant 0 : i32
    return %arg0, %arg1 : i32, i32
  }
}

</mosaic_0001>

<llo_original>
// kernel: tpu_custom_call.1
$region0: #{tpu_custom_call.1}
  #allocation0 [shape = 'u32[]', space=smem, size = 0x4, offset = 0x4, fixed_abs, tag = 'smem constant byte address 0x4 - core index']
  #allocation1 [shape = 'u32[144,128]{1,0:T(1,128)}', space=vmem, size = 0x12000, scoped, tag = 'internal scratch']
  %s0 = inlined_call_operand.hbm [shape: f32[16,128], index: 0, kind: input, shape index: {}]
  %s1 = inlined_call_operand.vmem [shape: f32[1,128], index: 1, kind: input, shape index: {}]
  %s2 = inlined_call_operand.vmem [shape: f32[1,128], index: 2, kind: input, shape index: {}]
  %s3 = inlined_call_operand.hbm [shape: bf16[128,128], index: 3, kind: input, shape index: {}]
  %s4 = inlined_call_operand.vmem [shape: f32[1,128], index: 4, kind: input, shape index: {}]
  %s5 = inlined_call_operand.hbm [shape: f32[16,128], index: 5, kind: output, shape index: {}]
  %s6 = sld [smem:[#allocation0]]
  $region38: #{tpu_custom_call.1} parent=0
    _
  %s8 = ssub.s32 1, %s6
  %s9 = scalar_select 0, %s8, %s6
  $region1: #{tpu_custom_call.1} parent=0
    #allocation2 [shape = 'u8[8192]{0}', space=vmem, size = 0x2000, scoped, tag = 'input window, operand 0, single buffered']
    #allocation3 [shape = 's32[1]{0}', space=sflag, size = 0x4, scoped, tag = 'scoped memory for tpu_custom_call.1']
    #allocation4 [shape = 's32[1]{0}', space=sflag, size = 0x4, scoped, tag = 'scoped memory for tpu_custom_call.1']
    #allocation5 [shape = 'u8[32768]{0}', space=vmem, size = 0x8000, scoped, tag = 'input window, operand 3, single buffered']
    #allocation6 [shape = 's32[1]{0}', space=sflag, size = 0x4, scoped, tag = 'scoped memory for tpu_custom_call.1']
    #allocation7 [shape = 'u8[8192]{0}', space=vmem, size = 0x2000, scoped, tag = 'output window, operand 0, single buffered']
    %10 = vsyncpa [#allocation3], 0
    %11 = vsyncpa [#allocation6], 0
    %12 = vsyncpa [#allocation4], 0
    // Predicated region
    $region2: #{tpu_custom_call.1} parent=1 // pred_check
      _
    $region3: #{tpu_custom_call.1} parent=1 // pred_check_branch
      %14 = sbr.rel (0) target = $region5
    $region4: #{tpu_custom_call.1} parent=1 // pred_region
      %s16 = ssub.s32 256, 256
      %17 = vsyncadd [#allocation3], %s16
      %s18 = sshll.u32 [#allocation2], 4
      %s19 = int_to_ptr.vmem [resolvable:$true] %s18
      %24 = dma.hbm_to_vmem [thread:$0]  %s0, 256, %s19, [#allocation3], 128, 128, 8
    $region5: #{tpu_custom_call.1} parent=1 // pred_fallthru
      _
    // Predicated region
    $region6: #{tpu_custom_call.1} parent=1 // pred_check
      _
    $region7: #{tpu_custom_call.1} parent=1 // pred_check_branch
      %26 = sbr.rel (0) target = $region9
    $region8: #{tpu_custom_call.1} parent=1 // pred_region
      _
    $region9: #{tpu_custom_call.1} parent=1 // pred_fallthru
      _
    // Predicated region
    $region10: #{tpu_custom_call.1} parent=1 // pred_check
      _
    $region11: #{tpu_custom_call.1} parent=1 // pred_check_branch
      %28 = sbr.rel (0) target = $region13
    $region12: #{tpu_custom_call.1} parent=1 // pred_region
      _
    $region13: #{tpu_custom_call.1} parent=1 // pred_fallthru
      _
    // Predicated region
    $region14: #{tpu_custom_call.1} parent=1 // pred_check
      _
    $region15: #{tpu_custom_call.1} parent=1 // pred_check_branch
      %30 = sbr.rel (0) target = $region17
    $region16: #{tpu_custom_call.1} parent=1 // pred_region
      %s32 = ssub.s32 1024, 1024
      %33 = vsyncadd [#allocation6], %s32
      %s34 = sshll.u32 [#allocation5], 4
      %s35 = int_to_ptr.vmem [resolvable:$true] %s34
      %40 = dma.hbm_to_vmem [thread:$0]  %s3, 1024, %s35, [#allocation6], 64, 64, 4
    $region17: #{tpu_custom_call.1} parent=1 // pred_fallthru
      _
    // Predicated region
    $region18: #{tpu_custom_call.1} parent=1 // pred_check
      _
    $region19: #{tpu_custom_call.1} parent=1 // pred_check_branch
      %42 = sbr.rel (0) target = $region21
    $region20: #{tpu_custom_call.1} parent=1 // pred_region
      _
    $region21: #{tpu_custom_call.1} parent=1 // pred_fallthru
      _
    // Predicated region
    $region22: #{tpu_custom_call.1} parent=1 // pred_check
      _
    $region23: #{tpu_custom_call.1} parent=1 // pred_check_branch
      %44 = sbr.rel (0) target = $region25
    $region24: #{tpu_custom_call.1} parent=1 // pred_region
      %45 = dma.done [#allocation3], 256
    $region25: #{tpu_custom_call.1} parent=1 // pred_fallthru
      _
    // Predicated region
    $region26: #{tpu_custom_call.1} parent=1 // pred_check
      _
    $region27: #{tpu_custom_call.1} parent=1 // pred_check_branch
      %47 = sbr.rel (0) target = $region29
    $region28: #{tpu_custom_call.1} parent=1 // pred_region
      %48 = dma.done [#allocation6], 1024
    $region29: #{tpu_custom_call.1} parent=1 // pred_fallthru
      _
    %v50 = vld [vmem:[#allocation2] sm:$0xff]
    %v51 = vld [vmem:[#allocation2 + $0x8] sm:$0xff]
    %52 = vadd.xlane.f32.xlu0 %v50
    %v53 = vpop.xlane.xlu0 %52
    %54 = vadd.xlane.f32.xlu0 %v51
    %v55 = vpop.xlane.xlu0 %54
    %v56 = vmul.f32 %v50, %v50
    %v57 = vmul.f32 %v51, %v51
    %58 = vadd.xlane.f32.xlu0 %v56
    %v59 = vpop.xlane.xlu0 %58
    %60 = vadd.xlane.f32.xlu0 %v57
    %v61 = vpop.xlane.xlu0 %60
    %v62 = vmul.f32 %v53, 0.0078125
    %v63 = vmul.f32 %v55, 0.0078125
    %v64 = vmul.f32 %v59, 0.0078125
    %v65 = vmul.f32 %v61, 0.0078125
    %v66 = vmul.f32 %v62, %v62
    %v67 = vmul.f32 %v63, %v63
    %v68 = vsub.f32 %v64, %v66
    %v69 = vsub.f32 %v65, %v67
    %v70 = vmax.f32 %v68, 0.0
    %v71 = vmax.f32 %v69, 0.0
    %v72 = vsub.f32 %v50, %v62
    %v73 = vsub.f32 %v51, %v63
    %v74 = vadd.f32 %v70, 1e-05
    %v75 = vadd.f32 %v71, 1e-05
    %v76 = vrsqrt.pop %v74
    %v77 = vrsqrt.pop %v75
    %v78 = vmul.f32 %v72, %v76
    %v79 = vmul.f32 %v73, %v77
    %v80 = vld [vmem:[%s1] sm:$0x1]
    %v82 = vlaneseq
    %v83 = vshrl.u32 %v82, 7
    %v84 = vsub.s32 0, %v83
    %v85 = vrot.slane %v80, %v84
    %v87 = vmul.f32 %v78, %v85
    %v88 = vmul.f32 %v79, %v85
    %v89 = vld [vmem:[%s2] sm:$0x1]
    %v91 = vlaneseq
    %v92 = vshrl.u32 %v91, 7
    %v93 = vsub.s32 0, %v92
    %v94 = vrot.slane %v89, %v93
    %v96 = vadd.f32 %v87, %v94
    %v97 = vadd.f32 %v88, %v94
    %v98 = vpack.c.bf16 %v97, %v96
    %v99 = vld [vmem:[#allocation5] sm:$0xf]
    %v100 = vld [vmem:[#allocation5 + $0x4] sm:$0xf]
    %v101 = vld [vmem:[#allocation5 + $0x8] sm:$0xf]
    %v102 = vld [vmem:[#allocation5 + $0xc] sm:$0xf]
    %v103 = vld [vmem:[#allocation5 + $0x10] sm:$0xf]
    %v104 = vld [vmem:[#allocation5 + $0x14] sm:$0xf]
    %v105 = vld [vmem:[#allocation5 + $0x18] sm:$0xf]
    %v106 = vld [vmem:[#allocation5 + $0x1c] sm:$0xf]
    %v107 = vld [vmem:[#allocation5 + $0x20] sm:$0xf]
    %v108 = vld [vmem:[#allocation5 + $0x24] sm:$0xf]
    %v109 = vld [vmem:[#allocation5 + $0x28] sm:$0xf]
    %v110 = vld [vmem:[#allocation5 + $0x2c] sm:$0xf]
    %v111 = vld [vmem:[#allocation5 + $0x30] sm:$0xf]
    %v112 = vld [vmem:[#allocation5 + $0x34] sm:$0xf]
    %v113 = vld [vmem:[#allocation5 + $0x38] sm:$0xf]
    %v114 = vld [vmem:[#allocation5 + $0x3c] sm:$0xf]
    %v115 = vld [vmem:[%s4] sm:$0x1]
    %v117 = vlaneseq
    %v118 = vshrl.u32 %v117, 7
    %v119 = vsub.s32 0, %v118
    %v120 = vrot.slane %v115, %v119
    %v138 = vunpack.c.l.b16 %v99
    %v139 = vunpack.c.l.b16 %v100
    %v140 = vunpack.c.l.b16 %v101
    %v141 = vunpack.c.l.b16 %v102
    %v142 = vunpack.c.l.b16 %v103
    %v143 = vunpack.c.l.b16 %v104
    %v144 = vunpack.c.l.b16 %v105
    %v145 = vunpack.c.l.b16 %v106
    %v146 = vunpack.c.l.b16 %v107
    %v147 = vunpack.c.l.b16 %v108
    %v148 = vunpack.c.l.b16 %v109
    %v149 = vunpack.c.l.b16 %v110
    %v150 = vunpack.c.l.b16 %v111
    %v151 = vunpack.c.l.b16 %v112
    %v152 = vunpack.c.l.b16 %v113
    %v153 = vunpack.c.l.b16 %v114
    %v154 = vpack.c.b16 %v139, %v138
    %v155 = vpack.c.b16 %v141, %v140
    %v156 = vpack.c.b16 %v143, %v142
    %v157 = vpack.c.b16 %v145, %v144
    %v158 = vpack.c.b16 %v147, %v146
    %v159 = vpack.c.b16 %v149, %v148
    %v160 = vpack.c.b16 %v151, %v150
    %v161 = vpack.c.b16 %v153, %v152
    %170 = vmatprep.subr.bf16.mxu0 0
    %171 = vmatpush1.bf16.msra.mxu0 %v154
    %172 = vmatprep.subr.bf16.mxu0 0
    %173 = vmatpush1.bf16.msra.mxu0 %v155
    %174 = vmatprep.subr.bf16.mxu0 0
    %175 = vmatpush1.bf16.msra.mxu0 %v156
    %176 = vmatprep.subr.bf16.mxu0 0
    %177 = vmatpush1.bf16.msra.mxu0 %v157
    %178 = vmatprep.subr.bf16.mxu0 0
    %179 = vmatpush1.bf16.msra.mxu0 %v158
    %180 = vmatprep.subr.bf16.mxu0 0
    %181 = vmatpush1.bf16.msra.mxu0 %v159
    %182 = vmatprep.subr.bf16.mxu0 0
    %183 = vmatpush1.bf16.msra.mxu0 %v160
    %184 = vmatprep.subr.bf16.mxu0 0
    %185 = vmatpush1.bf16.msra.mxu0 %v161
    %186 = vmatprep.subr.bf16.mxu0 0
    %187 = vmatpush1.bf16.msra.mxu0 0
    %188 = vmatprep.subr.bf16.mxu0 0
    %189 = vmatpush1.bf16.msra.mxu0 0
    %190 = vmatprep.subr.bf16.mxu0 0
    %191 = vmatpush1.bf16.msra.mxu0 0
    %192 = vmatprep.subr.bf16.mxu0 0
    %193 = vmatpush1.bf16.msra.mxu0 0
    %194 = vmatprep.subr.bf16.mxu0 0
    %195 = vmatpush1.bf16.msra.mxu0 0
    %196 = vmatprep.subr.bf16.mxu0 0
    %197 = vmatpush1.bf16.msra.mxu0 0
    %198 = vmatprep.subr.bf16.mxu0 0
    %199 = vmatpush1.bf16.msra.mxu0 0
    %200 = vmatprep.subr.bf16.mxu0 0
    %201 = vmatpush1.bf16.msra.mxu0 0
    %202 = vmatprep.mubr.bf16.mxu0 0
    %203 = vmatmul.mubr.bf16.gmra.mrb[0].mxu0 %v98
    %v204 = vpop.f32.mrb[0].mxu0
    %v205 = vadd.f32 %v120, %v204
    %v206 = vpop.f32.mrb[0].mxu0
    %v207 = vpop.f32.mrb[0].mxu0
    %v208 = vadd.f32 %v120, %v207
    %v209 = vpop.f32.mrb[0].mxu0
    %210 = vdwg.mxu0
    %211 = vst [vmem:[#allocation7] sm:$0xff] %v205
    %212 = vst [vmem:[#allocation7 + $0x8] sm:$0xff] %v208
    // Predicated region
    $region30: #{tpu_custom_call.1} parent=1 // pred_check
      _
    $region31: #{tpu_custom_call.1} parent=1 // pred_check_branch
      %214 = sbr.rel (0) target = $region33
    $region32: #{tpu_custom_call.1} parent=1 // pred_region
      %s216 = ssub.s32 256, 256
      %217 = vsyncadd [#allocation4], %s216
      %s218 = sshll.u32 [#allocation7], 4
      %s219 = int_to_ptr.vmem [resolvable:$true] %s218
      %224 = dma.vmem_to_hbm [thread:$0]  %s219, 256, %s5, [#allocation4], 128, 128, 8
    $region33: #{tpu_custom_call.1} parent=1 // pred_fallthru
      _
    // Predicated region
    $region34: #{tpu_custom_call.1} parent=1 // pred_check
      _
    $region35: #{tpu_custom_call.1} parent=1 // pred_check_branch
      %226 = sbr.rel (0) target = $region37
    $region36: #{tpu_custom_call.1} parent=1 // pred_region
      %227 = dma.done [#allocation4], 256
    $region37: #{tpu_custom_call.1} parent=1 // pred_fallthru
      _
    %228 = vsyncpa [#allocation3], 1
    %229 = vsyncpa [#allocation6], 1
    %230 = vsyncpa [#allocation4], 1

</llo_original>
